<compile_context>
chip_gen: v7x
topology: tpu7x:2x2x1
jax: 0.10.0
libtpu: 0.0.40
codegen_flags: <defaults>
</compile_context>

<pallas_src>
import functools

import jax
import jax.numpy as jnp
from jax.experimental import pallas as pl
from jax.experimental.pallas import tpu as pltpu


def _round_up(x, m):
    return ((x + m - 1) // m) * m


def _vmem_limit_bytes():
    """Generation-aware VMEM budget for the pallas_call."""
    try:
        cap = int(pltpu.get_tpu_info().vmem_capacity_bytes)
    except Exception:
        cap = 64 * 1024 * 1024  # conservative: assume v7x-class 64 MiB physical VMEM
    if cap <= 64 * 1024 * 1024:
        return 48 * 1024 * 1024                               # v7x: leave internal-scratch headroom
    return min(cap - 32 * 1024 * 1024, 100 * 1024 * 1024)     # v5e/v6e: ~96 MiB


def _pick_block_rows(n, c, itemsize, vmem_limit, requested=None):
    """Rows per batch tile, derived from the physical double-buffered VMEM footprint."""
    row_align = {4: 8, 2: 16, 1: 32}.get(int(itemsize), 8)
    in_row_bytes = int(itemsize) * _round_up(max(int(c), 1), 128)   # lane-padded input row
    tgt_row_bytes = 4 * 128                                          # (TN,1) i32 pads to 128 lanes
    per_row = 2 * (in_row_bytes + tgt_row_bytes)                     # x2 double-buffering
    usable = vmem_limit - 4 * 1024 * 1024                            # output + internal scratch
    max_rows = (usable // per_row) // row_align * row_align
    if max_rows < row_align:
        return 0, False                                              # even a minimal tile won't fit
    if requested is not None:
        rows = max(row_align, (int(requested) // row_align) * row_align)
        rows = min(rows, max_rows)                                   # validate user block_rows
    else:
        rows = max_rows
    # Keep >= 2 grid steps when the batch is big enough to split (v7x megacore).
    if n > 2 * row_align:
        rows = min(rows, _round_up((n + 1) // 2, row_align))
    if n <= rows:
        rows = n                                                     # single full-extent block
    return rows, True


def _onehot_kernel(x_ref, t_ref, o_ref, *, n, tn):
    """x_ref: (TN, C) logits (f32/bf16); t_ref: (TN, 1) i32 ids; o_ref: (1, 1, 128) f32."""
    x = x_ref[...].astype(jnp.float32)                          # VPU upcast, hidden under DMA
    t = t_ref[...]                                              # (TN, 1)
    # Fused one-hot subtract: d = x - onehot(t)  ==  where(class == t, x - 1, x).
    iota_c = jax.lax.broadcasted_iota(jnp.int32, x.shape, 1)    # (TN, C)
    d = jnp.where(iota_c == t, x - 1.0, x)
    ssq = jnp.sum(d * d, axis=1, keepdims=True)                 # (TN, 1), XLU row reduce
    if n % tn != 0:
        # Mask garbage rows of the final partial tile before sqrt / batch-sum.
        row = jax.lax.broadcasted_iota(jnp.int32, (tn, 1), 0) + pl.program_id(0) * tn
        ssq = jnp.where(row < n, ssq, 0.0)
    block_sum = jnp.sum(jnp.sqrt(ssq))                          # EUP sqrt + XLU reduce
    o_ref[...] = jnp.broadcast_to(block_sum, (1, 1, 128))       # lane-dense partial output


def _direct_kernel(x_ref, t_ref, o_ref, *, n, tn):
    """C == 1 path: target is already float with the same shape as input."""
    d = x_ref[...].astype(jnp.float32) - t_ref[...]             # (TN, 1)
    ssq = d * d
    if n % tn != 0:
        row = jax.lax.broadcasted_iota(jnp.int32, (tn, 1), 0) + pl.program_id(0) * tn
        ssq = jnp.where(row < n, ssq, 0.0)
    block_sum = jnp.sum(jnp.sqrt(ssq))
    o_ref[...] = jnp.broadcast_to(block_sum, (1, 1, 128))


def _reference(inp, target):
    """Plain-JAX reference mirroring the PyTorch module (also the tiny-shape fast path)."""
    inp = jnp.asarray(inp, jnp.float32)
    c = inp.shape[1]
    if c > 1:
        onehot = jax.nn.one_hot(jnp.asarray(target, jnp.int32), c, dtype=jnp.float32)
    else:
        onehot = jnp.asarray(target, jnp.float32).reshape(inp.shape)
    return jnp.sum(jnp.sqrt(jnp.sum((inp - onehot) ** 2, axis=1)), axis=0)


def class_mse_loss_v2(inp, target, *, block_rows=None):
    """Pallas implementation of ClassMSELossV2.forward.

    inp:    (N, C) float array (f32 or bf16 streamed natively; other dtypes cast to f32).
    target: (N,) integer class ids when C > 1, else float array broadcastable to
            inp's shape (the C == 1 branch of the PyTorch module).
    Returns a scalar float32 loss.
    """
    inp = jnp.asarray(inp)
    if inp.dtype.name not in ("float32", "bfloat16"):
        inp = inp.astype(jnp.float32)
    n, c = inp.shape

    # Tiny-shape fast path: fixed pallas_call + DMA setup would dominate.
    if block_rows is None and n * c * inp.dtype.itemsize < 256 * 1024:
        return _reference(inp, target)

    vmem_limit = _vmem_limit_bytes()
    tn, fits = _pick_block_rows(n, c, inp.dtype.itemsize, vmem_limit, block_rows)
    if not fits:
        # TODO(synk): class-axis blocking for vocab-scale C; plain-JAX fallback until then.
        return _reference(inp, target)

    g = pl.cdiv(n, tn)
    if c > 1:
        t2d = jnp.asarray(target, jnp.int32).reshape(n, 1)
        kernel = functools.partial(_onehot_kernel, n=n, tn=tn)
    else:
        t2d = jnp.asarray(target, jnp.float32).reshape(n, 1)
        kernel = functools.partial(_direct_kernel, n=n, tn=tn)

    partials = pl.pallas_call(
        kernel,
        out_shape=jax.ShapeDtypeStruct((g, 1, 128), jnp.float32),
        grid=(g,),
        in_specs=[
            pl.BlockSpec((tn, c), lambda i: (i, 0)),
            pl.BlockSpec((tn, 1), lambda i: (i, 0)),
        ],
        out_specs=pl.BlockSpec((1, 1, 128), lambda i: (i, 0, 0)),
        compiler_params=pltpu.CompilerParams(
            dimension_semantics=("parallel",),          # independent blocks -> megacore OK
            vmem_limit_bytes=int(vmem_limit),
        ),
    )(inp, t2d)

    # Tiny final reduction over per-block partials (one value per block).
    return jnp.sum(partials[:, 0, 0])


if __name__ == "__main__":
    key = jax.random.PRNGKey(0)
    k1, k2, k3, k4, k5, k6 = jax.random.split(key, 6)

    # 1) Nominal small classifier shape implied by the module (N=8, C=32):
    #    dispatches to the fused-XLA tiny-shape fast path.
    N, C = 8, 32
    x = jax.random.normal(k1, (N, C), dtype=jnp.float32)
    tgt = jax.random.randint(k2, (N,), 0, C, dtype=jnp.int32)
    loss = class_mse_loss_v2(x, tgt)
    jax.block_until_ready(loss)
    ref = _reference(x, tgt)
    assert jnp.allclose(loss, ref, rtol=1e-5, atol=1e-4), (loss, ref)

    # 2) Pallas path, f32, grid > 1 with a ragged tail (explicit block_rows forces the kernel).
    N2, C2 = 300, 32
    x2 = jax.random.normal(k3, (N2, C2), dtype=jnp.float32)
    t2 = jax.random.randint(k4, (N2,), 0, C2, dtype=jnp.int32)
    loss2 = class_mse_loss_v2(x2, t2, block_rows=128)
    jax.block_until_ready(loss2)
    ref2 = _reference(x2, t2)
    assert jnp.allclose(loss2, ref2, rtol=1e-5, atol=1e-3), (loss2, ref2)

    # 3) Pallas path, bf16 input streamed natively (upcast to f32 inside the kernel).
    N3, C3 = 480, 32
    x3 = jax.random.normal(k5, (N3, C3), dtype=jnp.float32).astype(jnp.bfloat16)
    t3 = jax.random.randint(k6, (N3,), 0, C3, dtype=jnp.int32)
    loss3 = class_mse_loss_v2(x3, t3, block_rows=128)
    jax.block_until_ready(loss3)
    ref3 = _reference(x3, t3)
    assert jnp.allclose(loss3, ref3, rtol=1e-4, atol=1e-2), (loss3, ref3)

    # 4) C == 1 branch via the Pallas kernel (target already float, same shape as input).
    x1 = jax.random.normal(k1, (16, 1), dtype=jnp.float32)
    t1 = jax.random.normal(k2, (16, 1), dtype=jnp.float32)
    loss1 = class_mse_loss_v2(x1, t1, block_rows=8)
    jax.block_until_ready(loss1)
    ref1 = _reference(x1, t1)
    assert jnp.allclose(loss1, ref1, rtol=1e-5, atol=1e-5), (loss1, ref1)

    print("KERNEL_OK")
</pallas_src>

<mosaic_0001>
module attributes {stable_mosaic.version = 11 : i64} {
  func.func @_onehot_kernel(%arg0: i32, %arg1: memref<128x32xf32, #tpu.memory_space<vmem>>, %arg2: memref<128x1xi32, #tpu.memory_space<vmem>>, %arg3: memref<1x1x128xf32, #tpu.memory_space<vmem>>) attributes {dimension_semantics = [#tpu.dimension_semantics<parallel>], iteration_bounds = array<i64: 3>, scalar_prefetch = 0 : i64, scratch_operands = 0 : i64, tpu.core_type = #tpu.core_type<tc>, window_params = [{transform_indices = @transform_0, window_bounds = array<i64: 128, 32>}, {transform_indices = @transform_1, window_bounds = array<i64: 128, 1>}, {transform_indices = @transform_2, window_bounds = array<i64: 1, 1, 128>}]} {
    %c0 = arith.constant 0 : index
    %c0_0 = arith.constant 0 : index
    %0 = vector.load %arg1[%c0, %c0_0] : memref<128x32xf32, #tpu.memory_space<vmem>>, vector<128x32xf32>
    %c0_1 = arith.constant 0 : index
    %c0_2 = arith.constant 0 : index
    %1 = vector.load %arg2[%c0_1, %c0_2] : memref<128x1xi32, #tpu.memory_space<vmem>>, vector<128x1xi32>
    %2 = tpu.iota {dimensions = array<i32: 1>} : vector<128x32xi32>
    %3 = vector.broadcast %1 : vector<128x1xi32> to vector<128x32xi32>
    %4 = arith.cmpi eq, %2, %3 : vector<128x32xi32>
    %cst = arith.constant 1.000000e+00 : f32
    %5 = vector.broadcast %cst : f32 to vector<128x32xf32>
    %6 = arith.subf %0, %5 : vector<128x32xf32>
    %7 = arith.select %4, %6, %0 : vector<128x32xi1>, vector<128x32xf32>
    %8 = arith.mulf %7, %7 : vector<128x32xf32>
    %cst_3 = arith.constant dense<0.000000e+00> : vector<128xf32>
    %9 = vector.multi_reduction <add>, %8, %cst_3 [1] : vector<128x32xf32> to vector<128xf32>
    %10 = vector.shape_cast %9 : vector<128xf32> to vector<128x1xf32>
    %11 = tpu.iota {dimensions = array<i32: 0>} : vector<128x1xi32>
    %c128_i32 = arith.constant 128 : i32
    %12 = arith.muli %arg0, %c128_i32 : i32
    %13 = vector.broadcast %12 : i32 to vector<128x1xi32>
    %14 = arith.addi %11, %13 : vector<128x1xi32>
    %c300_i32 = arith.constant 300 : i32
    %15 = vector.broadcast %c300_i32 : i32 to vector<128x1xi32>
    %16 = arith.cmpi slt, %14, %15 : vector<128x1xi32>
    %cst_4 = arith.constant 0.000000e+00 : f32
    %17 = vector.broadcast %cst_4 : f32 to vector<128x1xf32>
    %18 = arith.select %16, %10, %17 : vector<128x1xi1>, vector<128x1xf32>
    %19 = math.sqrt %18 : vector<128x1xf32>
    %20 = vector.shape_cast %19 : vector<128x1xf32> to vector<1x128x1xf32>
    %cst_5 = arith.constant dense<0.000000e+00> : vector<1xf32>
    %21 = vector.multi_reduction <add>, %20, %cst_5 [1, 2] : vector<1x128x1xf32> to vector<1xf32>
    %22 = vector.shape_cast %21 : vector<1xf32> to vector<1x1x1xf32>
    %23 = vector.extract %22[0, 0, 0] : f32 from vector<1x1x1xf32>
    %24 = vector.broadcast %23 : f32 to vector<1x1x128xf32>
    %c0_6 = arith.constant 0 : index
    %c0_7 = arith.constant 0 : index
    %c0_8 = arith.constant 0 : index
    %25 = vector.load %arg3[%c0_6, %c0_7, %c0_8] : memref<1x1x128xf32, #tpu.memory_space<vmem>>, vector<1x1x128xf32>
    tpu.vector_store %arg3[%c0_6, %c0_7, %c0_8], %24 {strides = array<i32>} : memref<1x1x128xf32, #tpu.memory_space<vmem>>, vector<1x1x128xf32>,
    return
  }
  func.func @transform_0(%arg0: i32) -> (i32, i32) {
    %c0_i32 = arith.constant 0 : i32
    %c0_i32_0 = arith.constant 0 : i32
    return %arg0, %c0_i32 : i32, i32
  }
  func.func @transform_1(%arg0: i32) -> (i32, i32) {
    %c0_i32 = arith.constant 0 : i32
    %c0_i32_0 = arith.constant 0 : i32
    return %arg0, %c0_i32 : i32, i32
  }
  func.func @transform_2(%arg0: i32) -> (i32, i32, i32) {
    %c0_i32 = arith.constant 0 : i32
    %c0_i32_0 = arith.constant 0 : i32
    %c0_i32_1 = arith.constant 0 : i32
    return %arg0, %c0_i32, %c0_i32_0 : i32, i32, i32
  }
}

</mosaic_0001>

<llo_original>
// kernel: tpu_custom_call.1
$region0: #{tpu_custom_call.1}
  #allocation0 [shape = 'u32[]', space=smem, size = 0x4, offset = 0x4, fixed_abs, tag = 'smem constant byte address 0x4 - core index']
  #allocation1 [shape = 'u32[144,128]{1,0:T(1,128)}', space=vmem, size = 0x12000, scoped, tag = 'internal scratch']
  %s0 = inlined_call_operand.vmem [shape: f32[300,32], index: 0, kind: input, shape index: {}]
  %s1 = inlined_call_operand.vmem [shape: s32[300,1], index: 1, kind: input, shape index: {}]
  %s2 = inlined_call_operand.hbm [shape: f32[3,1,128], index: 2, kind: output, shape index: {}]
  %s3 = sld [smem:[#allocation0]]
  $region41: #{tpu_custom_call.1} parent=0
    _
  %s5 = ssub.s32 1, %s3
  %s6 = scalar_select 0, %s5, %s3
  $region1: #{tpu_custom_call.1} parent=0
    #allocation2 [shape = 'u8[1024]{0}', space=vmem, size = 0x400, scoped, tag = 'output window, operand 0']
    #allocation3 [shape = 's32[2]{0}', space=sflag, size = 0x8, scoped, tag = 'scoped memory for tpu_custom_call.1']
    %7 = vsyncpa [#allocation3], 0
    %s8 = scalar_lea.sflag [#allocation3], 1
    %9 = vsyncpa %s8, 0
    loop: start=0, step=1, limit=5
    $region2: #{tpu_custom_call.1} parent=1 // loop_pre_header
      _
    $region3: #{tpu_custom_call.1} parent=1 // loop_header
      %s11 = sphi 0, %s15
      %p12 = scmp.ge.s32.totalorder %s11, 5
      %s21 = sphi 0, %s23
      %s24 = sphi 0, %s21
      %s25 = sphi 0, %s24
      %s41 = sphi 0, %s25
      %s47 = sphi 0, %s49
      %s50 = sphi 0, %s47
      %s51 = sphi 0, %s50
      %s67 = sphi 0, %s51
      %s73 = sphi 0, %s75
      %s76 = sphi 0, %s73
      %s77 = sphi 0, %s76
      %s93 = sphi 0, %s77
    $region4: #{tpu_custom_call.1} parent=1 // loop_header_branch
      %14 = sbr.rel (%p12) target = $region8
    $region5: #{tpu_custom_call.1} parent=1 // loop_body
      %s16 = ssub.s32 %s11, 1
      %s17 = ssub.s32 %s11, 2
      %s18 = sadd.s32 %s11, 1
      %s19 = ssub.s32 %s11, %s18
      %p20 = scmp.eq.s32.totalorder %s19, 0
      %s22 = sadd.s32 %s21, 1
      %s23 = scalar_select %p20, %s21, %s22
      %p26 = pneg %p20
      %p27 = scmp.eq.s32.totalorder %s11, 2
      %p28 = por %p26, %p27
      %p29 = scmp.ne.s32.totalorder %s21, %s24
      %p30 = scmp.eq.s32.totalorder %s11, 0
      %p31 = por %p29, %p30
      %p32 = scmp.ne.s32.totalorder %s21, %s24
      %p33 = scmp.eq.s32.totalorder %s16, 2
      %p34 = por %p32, %p33
      %p35 = scmp.ne.s32.totalorder %s24, %s25
      %p36 = scmp.eq.s32.totalorder %s16, 0
      %p37 = por %p35, %p36
      %p38 = scmp.ne.s32.totalorder %s24, %s25
      %p39 = scmp.eq.s32.totalorder %s17, 2
      %p40 = por %p38, %p39
      %p42 = scmp.ne.s32.totalorder %s25, %s41
      %p43 = scmp.eq.s32.totalorder %s17, 0
      %p44 = por %p42, %p43
      %s45 = ssub.s32 %s11, %s18
      %p46 = scmp.eq.s32.totalorder %s45, 0
      %s48 = sadd.s32 %s47, 1
      %s49 = scalar_select %p46, %s47, %s48
      %p52 = pneg %p46
      %p53 = scmp.eq.s32.totalorder %s11, 2
      %p54 = por %p52, %p53
      %p55 = scmp.ne.s32.totalorder %s47, %s50
      %p56 = scmp.eq.s32.totalorder %s11, 0
      %p57 = por %p55, %p56
      %p58 = scmp.ne.s32.totalorder %s47, %s50
      %p59 = scmp.eq.s32.totalorder %s16, 2
      %p60 = por %p58, %p59
      %p61 = scmp.ne.s32.totalorder %s50, %s51
      %p62 = scmp.eq.s32.totalorder %s16, 0
      %p63 = por %p61, %p62
      %p64 = scmp.ne.s32.totalorder %s50, %s51
      %p65 = scmp.eq.s32.totalorder %s17, 2
      %p66 = por %p64, %p65
      %p68 = scmp.ne.s32.totalorder %s51, %s67
      %p69 = scmp.eq.s32.totalorder %s17, 0
      %p70 = por %p68, %p69
      %s71 = ssub.s32 %s11, %s18
      %p72 = scmp.eq.s32.totalorder %s71, 0
      %s74 = sadd.s32 %s73, 1
      %s75 = scalar_select %p72, %s73, %s74
      %p78 = pneg %p72
      %p79 = scmp.eq.s32.totalorder %s11, 2
      %p80 = por %p78, %p79
      %p81 = scmp.ne.s32.totalorder %s73, %s76
      %p82 = scmp.eq.s32.totalorder %s11, 0
      %p83 = por %p81, %p82
      %p84 = scmp.ne.s32.totalorder %s73, %s76
      %p85 = scmp.eq.s32.totalorder %s16, 2
      %p86 = por %p84, %p85
      %p87 = scmp.ne.s32.totalorder %s76, %s77
      %p88 = scmp.eq.s32.totalorder %s16, 0
      %p89 = por %p87, %p88
      %p90 = scmp.ne.s32.totalorder %s76, %s77
      %p91 = scmp.eq.s32.totalorder %s17, 2
      %p92 = por %p90, %p91
      %p94 = scmp.ne.s32.totalorder %s77, %s93
      %p95 = scmp.eq.s32.totalorder %s17, 0
      %p96 = por %p94, %p95
      %p97 = scmp.le.s32.totalorder 1, %s11
      %p98 = scmp.lt.s32.totalorder %s11, 4
      %p99 = pnand %p97, %p98
      %p100 = pneg %p99
      // Predicated region
      $region9: #{tpu_custom_call.1} parent=5 // pred_check
        _
      $region10: #{tpu_custom_call.1} parent=5 // pred_check_branch
        %102 = sbr.rel (%p99) target = $region12
      $region11: #{tpu_custom_call.1} parent=5 // pred_region
        %s103 = ssub.s32 %s11, 1
      $region12: #{tpu_custom_call.1} parent=5 // pred_fallthru
        _
      %p104 = scmp.lt.s32.totalorder %s11, 3
      // Predicated region
      $region13: #{tpu_custom_call.1} parent=5 // pred_check
        %p105 = pneg %p104
      $region14: #{tpu_custom_call.1} parent=5 // pred_check_branch
        %107 = sbr.rel (%p105) target = $region16
      $region15: #{tpu_custom_call.1} parent=5 // pred_region
        // Predicated region
        $region17: #{tpu_custom_call.1} parent=15 // pred_check
          %p108 = pneg %p31
        $region18: #{tpu_custom_call.1} parent=15 // pred_check_branch
          %110 = sbr.rel (%p108) target = $region20
        $region19: #{tpu_custom_call.1} parent=15 // pred_region
          %s111 = smul.u32 16, %s11
          %s112 = ssub.s32 38, %s111
          %p113 = scmp.lt.s32.totalorder %s112, 16
          %s114 = scalar_select %p113, %s112, 16
          %s115 = smul.u32 128, %s114
          %p116 = scmp.lt.s32.totalorder %s111, 37
          %s117 = scalar_select %p116, %s111, 37
          %s118 = smul.addr %s117, 8
          %s119 = scalar_lea.vmem %s0, %s118
          %s120 = smul.u32 16, %s11
          %s121 = ssub.s32 38, %s120
          %p122 = scmp.lt.s32.totalorder %s121, 16
          %s123 = scalar_select %p122, %s121, 16
          %s124 = smul.u32 128, %s123
        $region20: #{tpu_custom_call.1} parent=15 // pred_fallthru
          _
        // Predicated region
        $region21: #{tpu_custom_call.1} parent=15 // pred_check
          %p125 = pneg %p57
        $region22: #{tpu_custom_call.1} parent=15 // pred_check_branch
          %127 = sbr.rel (%p125) target = $region24
        $region23: #{tpu_custom_call.1} parent=15 // pred_region
          %s128 = smul.u32 16, %s11
          %s129 = ssub.s32 38, %s128
          %p130 = scmp.lt.s32.totalorder %s129, 16
          %s131 = scalar_select %p130, %s129, 16
          %s132 = smul.u32 128, %s131
          %p133 = scmp.lt.s32.totalorder %s128, 37
          %s134 = scalar_select %p133, %s128, 37
          %s135 = smul.addr %s134, 8
          %s136 = scalar_lea.vmem %s1, %s135
          %s137 = smul.u32 16, %s11
          %s138 = ssub.s32 38, %s137
          %p139 = scmp.lt.s32.totalorder %s138, 16
          %s140 = scalar_select %p139, %s138, 16
          %s141 = smul.u32 128, %s140
        $region24: #{tpu_custom_call.1} parent=15 // pred_fallthru
          _
      $region16: #{tpu_custom_call.1} parent=5 // pred_fallthru
        _
      %p142 = scmp.le.s32.totalorder 1, %s11
      %p143 = scmp.lt.s32.totalorder %s11, 4
      %p144 = pnand %p142, %p143
      %p145 = pneg %p144
      // Predicated region
      $region25: #{tpu_custom_call.1} parent=5 // pred_check
        _
      $region26: #{tpu_custom_call.1} parent=5 // pred_check_branch
        %147 = sbr.rel (%p144) target = $region28
      $region27: #{tpu_custom_call.1} parent=5 // pred_region
        %s148 = ssub.s32 %s11, 1
        %s149 = smul.u32 16, %s16
        %s150 = ssub.s32 38, %s149
        %p151 = scmp.lt.s32.totalorder %s150, 16
        %s152 = scalar_select %p151, %s150, 16
        %s153 = smul.u32 128, %s152
        %p154 = scmp.lt.s32.totalorder %s149, 37
        %s155 = scalar_select %p154, %s149, 37
        %s156 = smul.addr %s155, 8
        %s157 = scalar_lea.vmem %s0, %s156
        %p158 = pneg %p37
        %p159 = pneg %p34
        %s160 = smul.u32 16, %s16
        %s161 = ssub.s32 38, %s160
        %p162 = scmp.lt.s32.totalorder %s161, 16
        %s163 = scalar_select %p162, %s161, 16
        %s164 = smul.u32 128, %s163
        %p165 = scmp.lt.s32.totalorder %s160, 37
        %s166 = scalar_select %p165, %s160, 37
        %s167 = smul.addr %s166, 8
        %s168 = scalar_lea.vmem %s1, %s167
        %p169 = pneg %p63
        %p170 = pneg %p60
        %p171 = pneg %p89
        %p172 = pneg %p86
        %s173 = sand.u32 %s76, 1
        %s174 = scalar_lea.sflag [#allocation3], %s173
        %s175 = sand.u32 %s76, 1
        %s176 = scalar_lea.vmem [#allocation2], %s175
        %s177 = smul.u32 16, %s16
        %s178 = ssub.s32 38, %s177
        %p179 = scmp.lt.s32.totalorder %s178, 16
        %s180 = scalar_select %p179, %s178, 16
        %s181 = smul.u32 128, %s180
        %p182 = scmp.lt.s32.totalorder %s177, 37
        %s183 = scalar_select %p182, %s177, 37
        %s184 = smul.addr %s183, 8
        %s185 = scalar_lea.vmem %s0, %s184
        %s186 = smul.u32 16, %s16
        %s187 = ssub.s32 38, %s186
        %p188 = scmp.lt.s32.totalorder %s187, 16
        %s189 = scalar_select %p188, %s187, 16
        %s190 = smul.u32 128, %s189
        %s191 = smul.u32 16, %s16
        %s192 = ssub.s32 38, %s191
        %p193 = scmp.lt.s32.totalorder %s192, 16
        %s194 = scalar_select %p193, %s192, 16
        %s195 = smul.u32 128, %s194
        %p196 = scmp.lt.s32.totalorder %s191, 37
        %s197 = scalar_select %p196, %s191, 37
        %s198 = smul.addr %s197, 8
        %s199 = scalar_lea.vmem %s1, %s198
        %s200 = smul.u32 16, %s16
        %s201 = ssub.s32 38, %s200
        %p202 = scmp.lt.s32.totalorder %s201, 16
        %s203 = scalar_select %p202, %s201, 16
        %s204 = smul.u32 128, %s203
        %v205 = vld [vmem:[%s185] sm:$0xff]
        %v206 = vld [vmem:[%s185 + $0x8] sm:$0xff]
        %v207 = vld [vmem:[%s185 + $0x10] sm:$0xff]
        %v208 = vld [vmem:[%s185 + $0x18] sm:$0xff]
        %v209 = vld [vmem:[%s185 + $0x20] sm:$0xff]
        %v210 = vld [vmem:[%s185 + $0x28] sm:$0xff]
        %v211 = vld [vmem:[%s185 + $0x30] sm:$0xff]
        %v212 = vld [vmem:[%s185 + $0x38] sm:$0xff]
        %v213 = vld [vmem:[%s185 + $0x40] sm:$0xff]
        %v214 = vld [vmem:[%s185 + $0x48] sm:$0xff]
        %v215 = vld [vmem:[%s185 + $0x50] sm:$0xff]
        %v216 = vld [vmem:[%s185 + $0x58] sm:$0xff]
        %v217 = vld [vmem:[%s185 + $0x60] sm:$0xff]
        %v218 = vld [vmem:[%s185 + $0x68] sm:$0xff]
        %v219 = vld [vmem:[%s185 + $0x70] sm:$0xff]
        %v220 = vld [vmem:[%s185 + $0x78] sm:$0xff]
        %v221 = vld [vmem:[%s199] sm:$0xff]
        %v222 = vld [vmem:[%s199 + $0x8] sm:$0xff]
        %v223 = vld [vmem:[%s199 + $0x10] sm:$0xff]
        %v224 = vld [vmem:[%s199 + $0x18] sm:$0xff]
        %v225 = vld [vmem:[%s199 + $0x20] sm:$0xff]
        %v226 = vld [vmem:[%s199 + $0x28] sm:$0xff]
        %v227 = vld [vmem:[%s199 + $0x30] sm:$0xff]
        %v228 = vld [vmem:[%s199 + $0x38] sm:$0xff]
        %v229 = vld [vmem:[%s199 + $0x40] sm:$0xff]
        %v230 = vld [vmem:[%s199 + $0x48] sm:$0xff]
        %v231 = vld [vmem:[%s199 + $0x50] sm:$0xff]
        %v232 = vld [vmem:[%s199 + $0x58] sm:$0xff]
        %v233 = vld [vmem:[%s199 + $0x60] sm:$0xff]
        %v234 = vld [vmem:[%s199 + $0x68] sm:$0xff]
        %v235 = vld [vmem:[%s199 + $0x70] sm:$0xff]
        %v236 = vld [vmem:[%s199 + $0x78] sm:$0xff]
        %v237 = vlaneseq
        %v238 = vand.u32 %v237, 127
        %239 = vset.pattern.permute.xlu0 0
        %240 = vperm.xlu0 %239, %v221
        %v241 = vpop.permute.xlu0 %240
        %242 = vset.pattern.permute.xlu0 0
        %243 = vperm.xlu0 %242, %v222
        %v244 = vpop.permute.xlu0 %243
        %245 = vset.pattern.permute.xlu0 0
        %246 = vperm.xlu0 %245, %v223
        %v247 = vpop.permute.xlu0 %246
        %248 = vset.pattern.permute.xlu0 0
        %249 = vperm.xlu0 %248, %v224
        %v250 = vpop.permute.xlu0 %249
        %251 = vset.pattern.permute.xlu0 0
        %252 = vperm.xlu0 %251, %v225
        %v253 = vpop.permute.xlu0 %252
        %254 = vset.pattern.permute.xlu0 0
        %255 = vperm.xlu0 %254, %v226
        %v256 = vpop.permute.xlu0 %255
        %257 = vset.pattern.permute.xlu0 0
        %258 = vperm.xlu0 %257, %v227
        %v259 = vpop.permute.xlu0 %258
        %260 = vset.pattern.permute.xlu0 0
        %261 = vperm.xlu0 %260, %v228
        %v262 = vpop.permute.xlu0 %261
        %263 = vset.pattern.permute.xlu0 0
        %264 = vperm.xlu0 %263, %v229
        %v265 = vpop.permute.xlu0 %264
        %266 = vset.pattern.permute.xlu0 0
        %267 = vperm.xlu0 %266, %v230
        %v268 = vpop.permute.xlu0 %267
        %269 = vset.pattern.permute.xlu0 0
        %270 = vperm.xlu0 %269, %v231
        %v271 = vpop.permute.xlu0 %270
        %272 = vset.pattern.permute.xlu0 0
        %273 = vperm.xlu0 %272, %v232
        %v274 = vpop.permute.xlu0 %273
        %275 = vset.pattern.permute.xlu0 0
        %276 = vperm.xlu0 %275, %v233
        %v277 = vpop.permute.xlu0 %276
        %278 = vset.pattern.permute.xlu0 0
        %279 = vperm.xlu0 %278, %v234
        %v280 = vpop.permute.xlu0 %279
        %281 = vset.pattern.permute.xlu0 0
        %282 = vperm.xlu0 %281, %v235
        %v283 = vpop.permute.xlu0 %282
        %284 = vset.pattern.permute.xlu0 0
        %285 = vperm.xlu0 %284, %v236
        %v286 = vpop.permute.xlu0 %285
        %vm287 = vcmp.eq.s32.totalorder %v238, %v241
        %vm288 = vcmp.eq.s32.totalorder %v238, %v244
        %vm289 = vcmp.eq.s32.totalorder %v238, %v247
        %vm290 = vcmp.eq.s32.totalorder %v238, %v250
        %vm291 = vcmp.eq.s32.totalorder %v238, %v253
        %vm292 = vcmp.eq.s32.totalorder %v238, %v256
        %vm293 = vcmp.eq.s32.totalorder %v238, %v259
        %vm294 = vcmp.eq.s32.totalorder %v238, %v262
        %vm295 = vcmp.eq.s32.totalorder %v238, %v265
        %vm296 = vcmp.eq.s32.totalorder %v238, %v268
        %vm297 = vcmp.eq.s32.totalorder %v238, %v271
        %vm298 = vcmp.eq.s32.totalorder %v238, %v274
        %vm299 = vcmp.eq.s32.totalorder %v238, %v277
        %vm300 = vcmp.eq.s32.totalorder %v238, %v280
        %vm301 = vcmp.eq.s32.totalorder %v238, %v283
        %vm302 = vcmp.eq.s32.totalorder %v238, %v286
        %v303 = vsub.f32 %v205, 1.0
        %v304 = vsub.f32 %v206, 1.0
        %v305 = vsub.f32 %v207, 1.0
        %v306 = vsub.f32 %v208, 1.0
        %v307 = vsub.f32 %v209, 1.0
        %v308 = vsub.f32 %v210, 1.0
        %v309 = vsub.f32 %v211, 1.0
        %v310 = vsub.f32 %v212, 1.0
        %v311 = vsub.f32 %v213, 1.0
        %v312 = vsub.f32 %v214, 1.0
        %v313 = vsub.f32 %v215, 1.0
        %v314 = vsub.f32 %v216, 1.0
        %v315 = vsub.f32 %v217, 1.0
        %v316 = vsub.f32 %v218, 1.0
        %v317 = vsub.f32 %v219, 1.0
        %v318 = vsub.f32 %v220, 1.0
        %v319 = vsel %vm287, %v303, %v205
        %v320 = vsel %vm288, %v304, %v206
        %v321 = vsel %vm289, %v305, %v207
        %v322 = vsel %vm290, %v306, %v208
        %v323 = vsel %vm291, %v307, %v209
        %v324 = vsel %vm292, %v308, %v210
        %v325 = vsel %vm293, %v309, %v211
        %v326 = vsel %vm294, %v310, %v212
        %v327 = vsel %vm295, %v311, %v213
        %v328 = vsel %vm296, %v312, %v214
        %v329 = vsel %vm297, %v313, %v215
        %v330 = vsel %vm298, %v314, %v216
        %v331 = vsel %vm299, %v315, %v217
        %v332 = vsel %vm300, %v316, %v218
        %v333 = vsel %vm301, %v317, %v219
        %v334 = vsel %vm302, %v318, %v220
        %v335 = vmul.f32 %v319, %v319
        %v336 = vmul.f32 %v320, %v320
        %v337 = vmul.f32 %v321, %v321
        %v338 = vmul.f32 %v322, %v322
        %v339 = vmul.f32 %v323, %v323
        %v340 = vmul.f32 %v324, %v324
        %v341 = vmul.f32 %v325, %v325
        %v342 = vmul.f32 %v326, %v326
        %v343 = vmul.f32 %v327, %v327
        %v344 = vmul.f32 %v328, %v328
        %v345 = vmul.f32 %v329, %v329
        %v346 = vmul.f32 %v330, %v330
        %v347 = vmul.f32 %v331, %v331
        %v348 = vmul.f32 %v332, %v332
        %v349 = vmul.f32 %v333, %v333
        %v350 = vmul.f32 %v334, %v334
        %vm351 = vcmask 261120
        %v352 = vsel %vm351, %v335, 0.0
        %353 = vadd.xlane.f32.xlu0 %v352
        %v354 = vpop.xlane.xlu0 %353
        %v355 = vsel %vm351, %v336, 0.0
        %356 = vadd.xlane.f32.xlu0 %v355
        %v357 = vpop.xlane.xlu0 %356
        %v358 = vsel %vm351, %v337, 0.0
        %359 = vadd.xlane.f32.xlu0 %v358
        %v360 = vpop.xlane.xlu0 %359
        %v361 = vsel %vm351, %v338, 0.0
        %362 = vadd.xlane.f32.xlu0 %v361
        %v363 = vpop.xlane.xlu0 %362
        %v364 = vsel %vm351, %v339, 0.0
        %365 = vadd.xlane.f32.xlu0 %v364
        %v366 = vpop.xlane.xlu0 %365
        %v367 = vsel %vm351, %v340, 0.0
        %368 = vadd.xlane.f32.xlu0 %v367
        %v369 = vpop.xlane.xlu0 %368
        %v370 = vsel %vm351, %v341, 0.0
        %371 = vadd.xlane.f32.xlu0 %v370
        %v372 = vpop.xlane.xlu0 %371
        %v373 = vsel %vm351, %v342, 0.0
        %374 = vadd.xlane.f32.xlu0 %v373
        %v375 = vpop.xlane.xlu0 %374
        %v376 = vsel %vm351, %v343, 0.0
        %377 = vadd.xlane.f32.xlu0 %v376
        %v378 = vpop.xlane.xlu0 %377
        %v379 = vsel %vm351, %v344, 0.0
        %380 = vadd.xlane.f32.xlu0 %v379
        %v381 = vpop.xlane.xlu0 %380
        %v382 = vsel %vm351, %v345, 0.0
        %383 = vadd.xlane.f32.xlu0 %v382
        %v384 = vpop.xlane.xlu0 %383
        %v385 = vsel %vm351, %v346, 0.0
        %386 = vadd.xlane.f32.xlu0 %v385
        %v387 = vpop.xlane.xlu0 %386
        %v388 = vsel %vm351, %v347, 0.0
        %389 = vadd.xlane.f32.xlu0 %v388
        %v390 = vpop.xlane.xlu0 %389
        %v391 = vsel %vm351, %v348, 0.0
        %392 = vadd.xlane.f32.xlu0 %v391
        %v393 = vpop.xlane.xlu0 %392
        %v394 = vsel %vm351, %v349, 0.0
        %395 = vadd.xlane.f32.xlu0 %v394
        %v396 = vpop.xlane.xlu0 %395
        %v397 = vsel %vm351, %v350, 0.0
        %398 = vadd.xlane.f32.xlu0 %v397
        %v399 = vpop.xlane.xlu0 %398
        %v400 = vlaneseq
        %v401 = vshrl.u32 %v400, 7
        %v402 = vadd.s32 %v401, 8
        %v403 = vadd.s32 %v401, 16
        %v404 = vadd.s32 %v401, 24
        %v405 = vadd.s32 %v401, 32
        %v406 = vadd.s32 %v401, 40
        %v407 = vadd.s32 %v401, 48
        %v408 = vadd.s32 %v401, 56
        %v409 = vadd.s32 %v401, 64
        %v410 = vadd.s32 %v401, 72
        %v411 = vadd.s32 %v401, 80
        %v412 = vadd.s32 %v401, 88
        %v413 = vadd.s32 %v401, 96
        %v414 = vadd.s32 %v401, 104
        %v415 = vadd.s32 %v401, 112
        %v416 = vadd.s32 %v401, 120
        %s417 = smul.u32 %s16, 128
        %v418 = vstv %s417
        %v419 = vadd.s32 %v401, %v418
        %v420 = vadd.s32 %v402, %v418
        %v421 = vadd.s32 %v403, %v418
        %v422 = vadd.s32 %v404, %v418
        %v423 = vadd.s32 %v405, %v418
        %v424 = vadd.s32 %v406, %v418
        %v425 = vadd.s32 %v407, %v418
        %v426 = vadd.s32 %v408, %v418
        %v427 = vadd.s32 %v409, %v418
        %v428 = vadd.s32 %v410, %v418
        %v429 = vadd.s32 %v411, %v418
        %v430 = vadd.s32 %v412, %v418
        %v431 = vadd.s32 %v413, %v418
        %v432 = vadd.s32 %v414, %v418
        %v433 = vadd.s32 %v415, %v418
        %v434 = vadd.s32 %v416, %v418
        %vm435 = vcmp.lt.s32.totalorder %v419, 300
        %vm436 = vcmp.lt.s32.totalorder %v420, 300
        %vm437 = vcmp.lt.s32.totalorder %v421, 300
        %vm438 = vcmp.lt.s32.totalorder %v422, 300
        %vm439 = vcmp.lt.s32.totalorder %v423, 300
        %vm440 = vcmp.lt.s32.totalorder %v424, 300
        %vm441 = vcmp.lt.s32.totalorder %v425, 300
        %vm442 = vcmp.lt.s32.totalorder %v426, 300
        %vm443 = vcmp.lt.s32.totalorder %v427, 300
        %vm444 = vcmp.lt.s32.totalorder %v428, 300
        %vm445 = vcmp.lt.s32.totalorder %v429, 300
        %vm446 = vcmp.lt.s32.totalorder %v430, 300
        %vm447 = vcmp.lt.s32.totalorder %v431, 300
        %vm448 = vcmp.lt.s32.totalorder %v432, 300
        %vm449 = vcmp.lt.s32.totalorder %v433, 300
        %vm450 = vcmp.lt.s32.totalorder %v434, 300
        %v451 = vsel %vm435, %v354, 0.0
        %v452 = vsel %vm436, %v357, 0.0
        %v453 = vsel %vm437, %v360, 0.0
        %v454 = vsel %vm438, %v363, 0.0
        %v455 = vsel %vm439, %v366, 0.0
        %v456 = vsel %vm440, %v369, 0.0
        %v457 = vsel %vm441, %v372, 0.0
        %v458 = vsel %vm442, %v375, 0.0
        %v459 = vsel %vm443, %v378, 0.0
        %v460 = vsel %vm444, %v381, 0.0
        %v461 = vsel %vm445, %v384, 0.0
        %v462 = vsel %vm446, %v387, 0.0
        %v463 = vsel %vm447, %v390, 0.0
        %v464 = vsel %vm448, %v393, 0.0
        %v465 = vsel %vm449, %v396, 0.0
        %v466 = vsel %vm450, %v399, 0.0
        %v467 = vrsqrt.pop %v451
        %v468 = vmul.f32 %v451, %v467
        %vm469 = vcmp.eq.f32.partialorder %v451, inf
        %v470 = vsel %vm469, %v451, %v468
        %vm471 = vcmp.eq.f32.partialorder %v451, 0.0
        %v472 = vand.u32 %v451, 2147483648
        %v473 = vsel %vm471, %v472, %v470
        %v474 = vrsqrt.pop %v452
        %v475 = vmul.f32 %v452, %v474
        %vm476 = vcmp.eq.f32.partialorder %v452, inf
        %v477 = vsel %vm476, %v452, %v475
        %vm478 = vcmp.eq.f32.partialorder %v452, 0.0
        %v479 = vand.u32 %v452, 2147483648
        %v480 = vsel %vm478, %v479, %v477
        %v481 = vrsqrt.pop %v453
        %v482 = vmul.f32 %v453, %v481
        %vm483 = vcmp.eq.f32.partialorder %v453, inf
        %v484 = vsel %vm483, %v453, %v482
        %vm485 = vcmp.eq.f32.partialorder %v453, 0.0
        %v486 = vand.u32 %v453, 2147483648
        %v487 = vsel %vm485, %v486, %v484
        %v488 = vrsqrt.pop %v454
        %v489 = vmul.f32 %v454, %v488
        %vm490 = vcmp.eq.f32.partialorder %v454, inf
        %v491 = vsel %vm490, %v454, %v489
        %vm492 = vcmp.eq.f32.partialorder %v454, 0.0
        %v493 = vand.u32 %v454, 2147483648
        %v494 = vsel %vm492, %v493, %v491
        %v495 = vrsqrt.pop %v455
        %v496 = vmul.f32 %v455, %v495
        %vm497 = vcmp.eq.f32.partialorder %v455, inf
        %v498 = vsel %vm497, %v455, %v496
        %vm499 = vcmp.eq.f32.partialorder %v455, 0.0
        %v500 = vand.u32 %v455, 2147483648
        %v501 = vsel %vm499, %v500, %v498
        %v502 = vrsqrt.pop %v456
        %v503 = vmul.f32 %v456, %v502
        %vm504 = vcmp.eq.f32.partialorder %v456, inf
        %v505 = vsel %vm504, %v456, %v503
        %vm506 = vcmp.eq.f32.partialorder %v456, 0.0
        %v507 = vand.u32 %v456, 2147483648
        %v508 = vsel %vm506, %v507, %v505
        %v509 = vrsqrt.pop %v457
        %v510 = vmul.f32 %v457, %v509
        %vm511 = vcmp.eq.f32.partialorder %v457, inf
        %v512 = vsel %vm511, %v457, %v510
        %vm513 = vcmp.eq.f32.partialorder %v457, 0.0
        %v514 = vand.u32 %v457, 2147483648
        %v515 = vsel %vm513, %v514, %v512
        %v516 = vrsqrt.pop %v458
        %v517 = vmul.f32 %v458, %v516
        %vm518 = vcmp.eq.f32.partialorder %v458, inf
        %v519 = vsel %vm518, %v458, %v517
        %vm520 = vcmp.eq.f32.partialorder %v458, 0.0
        %v521 = vand.u32 %v458, 2147483648
        %v522 = vsel %vm520, %v521, %v519
        %v523 = vrsqrt.pop %v459
        %v524 = vmul.f32 %v459, %v523
        %vm525 = vcmp.eq.f32.partialorder %v459, inf
        %v526 = vsel %vm525, %v459, %v524
        %vm527 = vcmp.eq.f32.partialorder %v459, 0.0
        %v528 = vand.u32 %v459, 2147483648
        %v529 = vsel %vm527, %v528, %v526
        %v530 = vrsqrt.pop %v460
        %v531 = vmul.f32 %v460, %v530
        %vm532 = vcmp.eq.f32.partialorder %v460, inf
        %v533 = vsel %vm532, %v460, %v531
        %vm534 = vcmp.eq.f32.partialorder %v460, 0.0
        %v535 = vand.u32 %v460, 2147483648
        %v536 = vsel %vm534, %v535, %v533
        %v537 = vrsqrt.pop %v461
        %v538 = vmul.f32 %v461, %v537
        %vm539 = vcmp.eq.f32.partialorder %v461, inf
        %v540 = vsel %vm539, %v461, %v538
        %vm541 = vcmp.eq.f32.partialorder %v461, 0.0
        %v542 = vand.u32 %v461, 2147483648
        %v543 = vsel %vm541, %v542, %v540
        %v544 = vrsqrt.pop %v462
        %v545 = vmul.f32 %v462, %v544
        %vm546 = vcmp.eq.f32.partialorder %v462, inf
        %v547 = vsel %vm546, %v462, %v545
        %vm548 = vcmp.eq.f32.partialorder %v462, 0.0
        %v549 = vand.u32 %v462, 2147483648
        %v550 = vsel %vm548, %v549, %v547
        %v551 = vrsqrt.pop %v463
        %v552 = vmul.f32 %v463, %v551
        %vm553 = vcmp.eq.f32.partialorder %v463, inf
        %v554 = vsel %vm553, %v463, %v552
        %vm555 = vcmp.eq.f32.partialorder %v463, 0.0
        %v556 = vand.u32 %v463, 2147483648
        %v557 = vsel %vm555, %v556, %v554
        %v558 = vrsqrt.pop %v464
        %v559 = vmul.f32 %v464, %v558
        %vm560 = vcmp.eq.f32.partialorder %v464, inf
        %v561 = vsel %vm560, %v464, %v559
        %vm562 = vcmp.eq.f32.partialorder %v464, 0.0
        %v563 = vand.u32 %v464, 2147483648
        %v564 = vsel %vm562, %v563, %v561
        %v565 = vrsqrt.pop %v465
        %v566 = vmul.f32 %v465, %v565
        %vm567 = vcmp.eq.f32.partialorder %v465, inf
        %v568 = vsel %vm567, %v465, %v566
        %vm569 = vcmp.eq.f32.partialorder %v465, 0.0
        %v570 = vand.u32 %v465, 2147483648
        %v571 = vsel %vm569, %v570, %v568
        %v572 = vrsqrt.pop %v466
        %v573 = vmul.f32 %v466, %v572
        %vm574 = vcmp.eq.f32.partialorder %v466, inf
        %v575 = vsel %vm574, %v466, %v573
        %vm576 = vcmp.eq.f32.partialorder %v466, 0.0
        %v577 = vand.u32 %v466, 2147483648
        %v578 = vsel %vm576, %v577, %v575
        %vm579 = vcmask 7168
        %v580 = vsel %vm579, %v473, 0.0
        %v581 = vsel %vm579, %v480, 0.0
        %v582 = vadd.f32 %v580, %v581
        %v583 = vsel %vm579, %v487, 0.0
        %v584 = vadd.f32 %v582, %v583
        %v585 = vsel %vm579, %v494, 0.0
        %v586 = vadd.f32 %v584, %v585
        %v587 = vsel %vm579, %v501, 0.0
        %v588 = vadd.f32 %v586, %v587
        %v589 = vsel %vm579, %v508, 0.0
        %v590 = vadd.f32 %v588, %v589
        %v591 = vsel %vm579, %v515, 0.0
        %v592 = vadd.f32 %v590, %v591
        %v593 = vsel %vm579, %v522, 0.0
        %v594 = vadd.f32 %v592, %v593
        %v595 = vsel %vm579, %v529, 0.0
        %v596 = vadd.f32 %v594, %v595
        %v597 = vsel %vm579, %v536, 0.0
        %v598 = vadd.f32 %v596, %v597
        %v599 = vsel %vm579, %v543, 0.0
        %v600 = vadd.f32 %v598, %v599
        %v601 = vsel %vm579, %v550, 0.0
        %v602 = vadd.f32 %v600, %v601
        %v603 = vsel %vm579, %v557, 0.0
        %v604 = vadd.f32 %v602, %v603
        %v605 = vsel %vm579, %v564, 0.0
        %v606 = vadd.f32 %v604, %v605
        %v607 = vsel %vm579, %v571, 0.0
        %v608 = vadd.f32 %v606, %v607
        %v609 = vsel %vm579, %v578, 0.0
        %v610 = vadd.f32 %v608, %v609
        %611 = vadd.xlane.f32.xlu0 %v610
        %v612 = vpop.xlane.xlu0 %611
        %v613 = vrot.slane %v612, 4
        %v614 = vadd.f32 %v612, %v613
        %v615 = vrot.slane %v614, 2
        %v616 = vadd.f32 %v614, %v615
        %v617 = vrot.slane %v616, 1
        %v618 = vadd.f32 %v616, %v617
        %s619 = vtos %v618
        %v620 = vstv %s619
        %621 = vst [vmem:[%s176] sm:$0x1] %v620
        %s622 = sand.u32 %s76, 1
        %s623 = scalar_lea.sflag [#allocation3], %s622
        %s624 = sand.u32 %s76, 1
        %s625 = scalar_lea.vmem [#allocation2], %s624
        // Predicated region
        $region29: #{tpu_custom_call.1} parent=27 // pred_check
          %p626 = pneg %p86
        $region30: #{tpu_custom_call.1} parent=27 // pred_check_branch
          %628 = sbr.rel (%p626) target = $region32
        $region31: #{tpu_custom_call.1} parent=27 // pred_region
          %s630 = ssub.s32 16, 16
          %631 = vsyncadd %s623, %s630
          %s632 = smul.addr %s16, 16
          %s633 = scalar_lea.hbm %s2, %s632
          %s635 = sshll.u32 %s625, 4
          %s636 = int_to_ptr.vmem [resolvable:$true] %s635
          %638 = dma.vmem_to_hbm [thread:$0]  %s636, 16, %s633, %s623
        $region32: #{tpu_custom_call.1} parent=27 // pred_fallthru
          _
      $region28: #{tpu_custom_call.1} parent=5 // pred_fallthru
        _
      %p639 = scmp.le.s32.totalorder 2, %s11
      // Predicated region
      $region33: #{tpu_custom_call.1} parent=5 // pred_check
        %p640 = pneg %p639
      $region34: #{tpu_custom_call.1} parent=5 // pred_check_branch
        %642 = sbr.rel (%p640) target = $region36
      $region35: #{tpu_custom_call.1} parent=5 // pred_region
        %s643 = ssub.s32 %s11, 2
        // Predicated region
        $region37: #{tpu_custom_call.1} parent=35 // pred_check
          %p644 = pneg %p92
        $region38: #{tpu_custom_call.1} parent=35 // pred_check_branch
          %646 = sbr.rel (%p644) target = $region40
        $region39: #{tpu_custom_call.1} parent=35 // pred_region
          %s647 = sand.u32 %s77, 1
          %s648 = scalar_lea.sflag [#allocation3], %s647
          %s649 = sand.u32 %s77, 1
          %s650 = scalar_lea.vmem [#allocation2], %s649
          %651 = dma.done %s648, 16
        $region40: #{tpu_custom_call.1} parent=35 // pred_fallthru
          _
      $region36: #{tpu_custom_call.1} parent=5 // pred_fallthru
        _
    $region6: #{tpu_custom_call.1} parent=1 // loop_footer
      %s15 = sadd.s32 1, %s11
    $region7: #{tpu_custom_call.1} parent=1 // loop_footer_branch
      %10 = sbr.rel target = $region3
    $region8: #{tpu_custom_call.1} parent=1 // loop_exit
      _
    %652 = vsyncpa [#allocation3], 1
    %s653 = scalar_lea.sflag [#allocation3], 1
    %654 = vsyncpa %s653, 1

</llo_original>
